<compile_context>
chip_gen: v7x
topology: tpu7x:2x2x1
jax: 0.10.0
libtpu: 0.0.40
codegen_flags: <defaults>
</compile_context>

<pallas_src>
import functools
from functools import lru_cache

import numpy as np
import jax
import jax.numpy as jnp
from jax.experimental import pallas as pl
from jax.experimental.pallas import tpu as pltpu


def transform_kernel(x_ref, w_ref, b_ref, bmax_ref, gsum_ref, expand_ref,
                     fold_ref, out_ref, *, k, d):
    kd = k * d
    x = x_ref[...].astype(jnp.float32)                     # (TN, k*d), lane-dense

    # (1) Grouped-conv logits, ONE MXU matmul, j-major columns:
    #     logits[n, j*k + i] = <Wkk[i,j,:], x[n,i,:]> + bkk[i,j]
    logits = jnp.dot(x, w_ref[...],
                     preferred_element_type=jnp.float32) + b_ref[...]   # (TN, k*k)

    # (2) Per-group (over j) max, kept for softmax robustness.  With j-major
    #     ordering the j-th entries of every group form a CONTIGUOUS k-lane
    #     slice, so k-1 slice maxima replace k narrow XLU reductions; the max
    #     is broadcast back onto all k*k lanes with a tiny 0/1 MXU matmul.
    gmax = logits[:, 0:k]
    for j in range(1, k):
        gmax = jnp.maximum(gmax, logits[:, j * k:(j + 1) * k])          # (TN, k)
    gmax_b = jnp.dot(gmax, bmax_ref[...],
                     preferred_element_type=jnp.float32)                # (TN, k*k)

    # (3) ONE exp over the whole logits tile (single EUP pass, no 4-lane slices).
    p = jnp.exp(logits - gmax_b)                                        # (TN, k*k)

    # (4) Group sums, already broadcast into the (TN, k*d) output layout (MXU).
    s = jnp.dot(p, gsum_ref[...], preferred_element_type=jnp.float32)   # (TN, k*d)

    # (5) Expand p so p[n,i,j] sits over x-group j for every output group i
    #     (MXU), multiply by x tiled k times (vreg copies), fold the k groups
    #     back with one more 0/1 MXU matmul -- no lane-broadcasts, no rolls.
    pe = jnp.dot(p, expand_ref[...],
                 preferred_element_type=jnp.float32)                    # (TN, k*k*d)
    xt = jnp.concatenate([x] * k, axis=-1)                              # (TN, k*k*d)
    u = jnp.dot(pe * xt, fold_ref[...],
                preferred_element_type=jnp.float32)                     # (TN, k*d)

    # (6) Normalize (EUP reciprocal + one Newton step -> ~f32 exact) and issue
    #     ONE full-width, unmasked store.
    inv = pl.reciprocal(s, approx=True)
    inv = inv * (2.0 - s * inv)
    out_ref[...] = (u * inv).astype(out_ref.dtype)


@lru_cache(maxsize=None)
def _combine_constants(k, d):
    """0/1 matrices that move broadcasts/reductions onto the MXU."""
    kd, kk = k * d, k * k
    bmax = np.zeros((k, kk), np.float32)        # (TN,k) group max -> (TN,kk)
    gsum = np.zeros((kk, kd), np.float32)       # (TN,kk) P -> per-group sums in (TN,kd)
    expand = np.zeros((kk, k * kd), np.float32)  # (TN,kk) P -> (TN, k*kd) expansion
    fold = np.zeros((k * kd, kd), np.float32)   # (TN,k*kd) products -> (TN,kd) sums
    for i in range(k):
        bmax[i, i::k] = 1.0                      # column j*k + i, all j
        for j in range(k):
            gsum[j * k + i, i * d:(i + 1) * d] = 1.0
            expand[j * k + i, i * kd + j * d:i * kd + (j + 1) * d] = 1.0
            fold[i * kd + j * d:i * kd + (j + 1) * d, i * d:(i + 1) * d] = np.eye(
                d, dtype=np.float32)
    return (jnp.asarray(bmax), jnp.asarray(gsum),
            jnp.asarray(expand), jnp.asarray(fold))


def _num_tensorcores():
    """Best-effort TensorCores-per-chip (2 on megacore chips: v4 / v5p / v7x)."""
    try:
        kind = (getattr(jax.devices()[0], "device_kind", "") or "").lower()
    except Exception:
        return 1
    return 2 if ("7" in kind or "v4" in kind or "v5p" in kind) else 1


def _choose_rows(n, min_steps, target=1024):
    """Row tile: as close to `target` as possible while giving >= min_steps steps."""
    tn = min(target, max(8, -(-n // max(1, min_steps))))
    return -(-tn // 8) * 8                       # round UP to a multiple of 8


def transform(x, wkk, bkk, *, tn=None, bf16_io=False):
    """x: (N, k, d); wkk: (k, k, d); bkk: (k, k)  ->  (N, k, d)."""
    N, k, d = x.shape
    kd, kk = k * d, k * k

    n_tc = _num_tensorcores()
    min_steps = 3 * n_tc if n_tc > 1 else 2      # v7x: >=3 steps per TensorCore
    if tn is None:
        tn = _choose_rows(N, min_steps)
    tn = max(8, -(-int(tn) // 8) * 8)

    # Pad N up to a multiple of the tile so awkward batch sizes never collapse
    # the tile (padded rows are zeros; their softmax is finite and sliced off).
    n_pad = (-N) % tn
    n_total = N + n_pad

    io_dtype = jnp.bfloat16 if bf16_io else x.dtype
    x2d = x.reshape(N, kd).astype(io_dtype)
    if n_pad:
        x2d = jnp.concatenate([x2d, jnp.zeros((n_pad, kd), io_dtype)], axis=0)

    # Block-diagonal grouped-conv weight in j-major column order + matching bias.
    f32 = jnp.float32
    eye_k = jnp.eye(k, dtype=f32)
    wjm = jnp.einsum("ijf,li->lfji", wkk.astype(f32), eye_k).reshape(kd, kk)
    bjm = bkk.astype(f32).T.reshape(1, kk)
    bmax, gsum, expand, fold = _combine_constants(k, d)

    # VMEM budget: actual need (3-deep input + 2-deep output + constants +
    # in-kernel f32 temporaries) plus headroom; no blanket 32/48 MiB floor.
    io_bytes = jnp.dtype(io_dtype).itemsize
    vmem_need = ((3 + 2) * tn * kd * io_bytes
                 + 2 * (kd * kk + kk + k * kk + kk * kd + kk * k * kd
                        + k * kd * kd) * 4
                 + tn * (3 * k * kd + 6 * kd + 4 * kk) * 4)
    vmem_limit = int(min(48 << 20, vmem_need + (16 << 20)))

    grid = (n_total // tn,)
    kernel = functools.partial(transform_kernel, k=k, d=d)
    out_shape = jax.ShapeDtypeStruct((n_total, kd), io_dtype)

    def const_spec(shape):
        return pl.BlockSpec(shape, lambda n: (0,) * len(shape))

    def run(extra_input_buffering):
        if extra_input_buffering:
            x_spec = pl.BlockSpec((tn, kd), lambda n: (n, 0),
                                  pipeline_mode=pl.Buffered(3))
        else:
            x_spec = pl.BlockSpec((tn, kd), lambda n: (n, 0))
        return pl.pallas_call(
            kernel,
            out_shape=out_shape,
            grid_spec=pl.GridSpec(
                grid=grid,
                in_specs=[x_spec,
                          const_spec((kd, kk)),
                          const_spec((1, kk)),
                          const_spec((k, kk)),
                          const_spec((kk, kd)),
                          const_spec((kk, k * kd)),
                          const_spec((k * kd, kd))],
                out_specs=pl.BlockSpec((tn, kd), lambda n: (n, 0)),
            ),
            compiler_params=pltpu.CompilerParams(
                dimension_semantics=("parallel",),
                vmem_limit_bytes=vmem_limit,
            ),
        )(x2d, wjm, bjm, bmax, gsum, expand, fold)

    try:
        out2d = run(True)          # 3-deep input buffering
    except Exception:              # pipeline_mode/Buffered unsupported -> default 2-deep
        out2d = run(False)

    if n_pad:
        out2d = out2d[:N]
    return out2d.reshape(N, k, d).astype(x.dtype)


def transform_ref(x, wkk, bkk):
    """Pure-JAX reference mirroring the PyTorch forward (dropout is a no-op)."""
    logits = jnp.einsum("nid,ijd->nij", x, wkk) + bkk[None]   # grouped Conv1d, kernel=d
    m = jax.nn.softmax(logits, axis=-1)
    return jnp.einsum("nij,njd->nid", m, x)                   # matmul(multiplier, x)


if __name__ == "__main__":
    N, k, d = 64, 4, 32            # region_feats: (N, k, d) -- small demo shapes
    key = jax.random.PRNGKey(0)
    kx, kw, kb = jax.random.split(key, 3)

    x = jax.random.normal(kx, (N, k, d), dtype=jnp.float32)

    # nn.Conv1d(k, k*k, dim_in, groups=k): weight (k*k, 1, d), bias (k*k,)
    w_conv = 0.1 * jax.random.normal(kw, (k * k, 1, d), dtype=jnp.float32)
    b_conv = 0.1 * jax.random.normal(kb, (k * k,), dtype=jnp.float32)
    wkk = w_conv.reshape(k, k, d)   # group i -> output channels [i*k:(i+1)*k]
    bkk = b_conv.reshape(k, k)

    out = jax.block_until_ready(transform(x, wkk, bkk))
    ref = transform_ref(x, wkk, bkk)
    assert out.shape == (N, k, d)
    assert jnp.allclose(out, ref, atol=1e-5, rtol=1e-5), (
        "mismatch vs reference: max abs err = "
        f"{float(jnp.max(jnp.abs(out - ref))):.3e}")

    # Exercise the padded / awkward-batch path as well (N not a multiple of 8).
    N2 = 25
    x2 = jax.random.normal(jax.random.PRNGKey(1), (N2, k, d), dtype=jnp.float32)
    out2 = jax.block_until_ready(transform(x2, wkk, bkk))
    ref2 = transform_ref(x2, wkk, bkk)
    assert jnp.allclose(out2, ref2, atol=1e-5, rtol=1e-5), "padded-path mismatch"

    print("KERNEL_OK")
</pallas_src>

<mosaic_0001>
module attributes {stable_mosaic.version = 11 : i64} {
  func.func @transform_kernel(%arg0: i32, %arg1: memref<32x128xf32, #tpu.memory_space<vmem>>, %arg2: memref<128x16xf32, #tpu.memory_space<vmem>>, %arg3: memref<1x16xf32, #tpu.memory_space<vmem>>, %arg4: memref<4x16xf32, #tpu.memory_space<vmem>>, %arg5: memref<16x128xf32, #tpu.memory_space<vmem>>, %arg6: memref<16x512xf32, #tpu.memory_space<vmem>>, %arg7: memref<512x128xf32, #tpu.memory_space<vmem>>, %arg8: memref<32x128xf32, #tpu.memory_space<vmem>>) attributes {dimension_semantics = [#tpu.dimension_semantics<parallel>], iteration_bounds = array<i64: 2>, scalar_prefetch = 0 : i64, scratch_operands = 0 : i64, tpu.core_type = #tpu.core_type<tc>, window_params = [{transform_indices = @transform_0, window_bounds = array<i64: 32, 128>}, {pipeline_mode = #tpu.pipeline_mode<synchronous>, transform_indices = @transform_1, window_bounds = array<i64: 128, 16>}, {pipeline_mode = #tpu.pipeline_mode<synchronous>, transform_indices = @transform_2, window_bounds = array<i64: 1, 16>}, {pipeline_mode = #tpu.pipeline_mode<synchronous>, transform_indices = @transform_3, window_bounds = array<i64: 4, 16>}, {pipeline_mode = #tpu.pipeline_mode<synchronous>, transform_indices = @transform_4, window_bounds = array<i64: 16, 128>}, {pipeline_mode = #tpu.pipeline_mode<synchronous>, transform_indices = @transform_5, window_bounds = array<i64: 16, 512>}, {pipeline_mode = #tpu.pipeline_mode<synchronous>, transform_indices = @transform_6, window_bounds = array<i64: 512, 128>}, {transform_indices = @transform_7, window_bounds = array<i64: 32, 128>}]} {
    %c0 = arith.constant 0 : index
    %c0_0 = arith.constant 0 : index
    %0 = vector.load %arg1[%c0, %c0_0] : memref<32x128xf32, #tpu.memory_space<vmem>>, vector<32x128xf32>
    %c0_1 = arith.constant 0 : index
    %c0_2 = arith.constant 0 : index
    %1 = vector.load %arg2[%c0_1, %c0_2] : memref<128x16xf32, #tpu.memory_space<vmem>>, vector<128x16xf32>
    %cst = arith.constant dense<0.000000e+00> : vector<32x16xf32>
    %2 = tpu.matmul %0, %1, %cst {dimension_numbers = #tpu.dot_dimension_numbers<[1], [0], [0], [1], [0, 0, 1, 1], [], []>} : vector<32x128xf32>, vector<128x16xf32>, vector<32x16xf32> -> vector<32x16xf32>
    %c0_3 = arith.constant 0 : index
    %c0_4 = arith.constant 0 : index
    %3 = vector.load %arg3[%c0_3, %c0_4] : memref<1x16xf32, #tpu.memory_space<vmem>>, vector<1x16xf32>
    %4 = vector.broadcast %3 : vector<1x16xf32> to vector<32x16xf32>
    %5 = arith.addf %2, %4 : vector<32x16xf32>
    %6 = vector.extract_strided_slice %5 {offsets = [0, 0], sizes = [32, 4], strides = [1, 1]} : vector<32x16xf32> to vector<32x4xf32>
    %7 = vector.extract_strided_slice %5 {offsets = [0, 4], sizes = [32, 4], strides = [1, 1]} : vector<32x16xf32> to vector<32x4xf32>
    %8 = arith.maximumf %6, %7 : vector<32x4xf32>
    %9 = vector.extract_strided_slice %5 {offsets = [0, 8], sizes = [32, 4], strides = [1, 1]} : vector<32x16xf32> to vector<32x4xf32>
    %10 = arith.maximumf %8, %9 : vector<32x4xf32>
    %11 = vector.extract_strided_slice %5 {offsets = [0, 12], sizes = [32, 4], strides = [1, 1]} : vector<32x16xf32> to vector<32x4xf32>
    %12 = arith.maximumf %10, %11 : vector<32x4xf32>
    %c0_5 = arith.constant 0 : index
    %c0_6 = arith.constant 0 : index
    %13 = vector.load %arg4[%c0_5, %c0_6] : memref<4x16xf32, #tpu.memory_space<vmem>>, vector<4x16xf32>
    %cst_7 = arith.constant dense<0.000000e+00> : vector<32x16xf32>
    %14 = tpu.matmul %12, %13, %cst_7 {dimension_numbers = #tpu.dot_dimension_numbers<[1], [0], [0], [1], [0, 0, 1, 1], [], []>} : vector<32x4xf32>, vector<4x16xf32>, vector<32x16xf32> -> vector<32x16xf32>
    %15 = arith.subf %5, %14 : vector<32x16xf32>
    %16 = math.exp %15 : vector<32x16xf32>
    %c0_8 = arith.constant 0 : index
    %c0_9 = arith.constant 0 : index
    %17 = vector.load %arg5[%c0_8, %c0_9] : memref<16x128xf32, #tpu.memory_space<vmem>>, vector<16x128xf32>
    %cst_10 = arith.constant dense<0.000000e+00> : vector<32x128xf32>
    %18 = tpu.matmul %16, %17, %cst_10 {dimension_numbers = #tpu.dot_dimension_numbers<[1], [0], [0], [1], [0, 0, 1, 1], [], []>} : vector<32x16xf32>, vector<16x128xf32>, vector<32x128xf32> -> vector<32x128xf32>
    %c0_11 = arith.constant 0 : index
    %c0_12 = arith.constant 0 : index
    %19 = vector.load %arg6[%c0_11, %c0_12] : memref<16x512xf32, #tpu.memory_space<vmem>>, vector<16x512xf32>
    %cst_13 = arith.constant dense<0.000000e+00> : vector<32x512xf32>
    %20 = tpu.matmul %16, %19, %cst_13 {dimension_numbers = #tpu.dot_dimension_numbers<[1], [0], [0], [1], [0, 0, 1, 1], [], []>} : vector<32x16xf32>, vector<16x512xf32>, vector<32x512xf32> -> vector<32x512xf32>
    %21 = tpu.concatenate %0, %0, %0, %0 in 1 : vector<32x128xf32>, vector<32x128xf32>, vector<32x128xf32>, vector<32x128xf32> -> vector<32x512xf32>
    %22 = arith.mulf %20, %21 : vector<32x512xf32>
    %c0_14 = arith.constant 0 : index
    %c0_15 = arith.constant 0 : index
    %23 = vector.load %arg7[%c0_14, %c0_15] : memref<512x128xf32, #tpu.memory_space<vmem>>, vector<512x128xf32>
    %cst_16 = arith.constant dense<0.000000e+00> : vector<32x128xf32>
    %24 = tpu.matmul %22, %23, %cst_16 {dimension_numbers = #tpu.dot_dimension_numbers<[1], [0], [0], [1], [0, 0, 1, 1], [], []>} : vector<32x512xf32>, vector<512x128xf32>, vector<32x128xf32> -> vector<32x128xf32>
    %25 = tpu.reciprocal %18 {approx = true} : vector<32x128xf32> -> vector<32x128xf32>
    %26 = arith.mulf %18, %25 : vector<32x128xf32>
    %cst_17 = arith.constant 2.000000e+00 : f32
    %27 = vector.broadcast %cst_17 : f32 to vector<32x128xf32>
    %28 = arith.subf %27, %26 : vector<32x128xf32>
    %29 = arith.mulf %25, %28 : vector<32x128xf32>
    %30 = arith.mulf %24, %29 : vector<32x128xf32>
    %c0_18 = arith.constant 0 : index
    %c0_19 = arith.constant 0 : index
    %31 = vector.load %arg8[%c0_18, %c0_19] : memref<32x128xf32, #tpu.memory_space<vmem>>, vector<32x128xf32>
    tpu.vector_store %arg8[%c0_18, %c0_19], %30 {strides = array<i32>} : memref<32x128xf32, #tpu.memory_space<vmem>>, vector<32x128xf32>,
    return
  }
  func.func @transform_0(%arg0: i32) -> (i32, i32) {
    %c0_i32 = arith.constant 0 : i32
    %c0_i32_0 = arith.constant 0 : i32
    return %arg0, %c0_i32 : i32, i32
  }
  func.func @transform_1(%arg0: i32) -> (i32, i32) {
    %c0_i32 = arith.constant 0 : i32
    %c0_i32_0 = arith.constant 0 : i32
    %c0_i32_1 = arith.constant 0 : i32
    return %c0_i32, %c0_i32_0 : i32, i32
  }
  func.func @transform_2(%arg0: i32) -> (i32, i32) {
    %c0_i32 = arith.constant 0 : i32
    %c0_i32_0 = arith.constant 0 : i32
    %c0_i32_1 = arith.constant 0 : i32
    return %c0_i32, %c0_i32_0 : i32, i32
  }
  func.func @transform_3(%arg0: i32) -> (i32, i32) {
    %c0_i32 = arith.constant 0 : i32
    %c0_i32_0 = arith.constant 0 : i32
    %c0_i32_1 = arith.constant 0 : i32
    return %c0_i32, %c0_i32_0 : i32, i32
  }
  func.func @transform_4(%arg0: i32) -> (i32, i32) {
    %c0_i32 = arith.constant 0 : i32
    %c0_i32_0 = arith.constant 0 : i32
    %c0_i32_1 = arith.constant 0 : i32
    return %c0_i32, %c0_i32_0 : i32, i32
  }
  func.func @transform_5(%arg0: i32) -> (i32, i32) {
    %c0_i32 = arith.constant 0 : i32
    %c0_i32_0 = arith.constant 0 : i32
    %c0_i32_1 = arith.constant 0 : i32
    return %c0_i32, %c0_i32_0 : i32, i32
  }
  func.func @transform_6(%arg0: i32) -> (i32, i32) {
    %c0_i32 = arith.constant 0 : i32
    %c0_i32_0 = arith.constant 0 : i32
    %c0_i32_1 = arith.constant 0 : i32
    return %c0_i32, %c0_i32_0 : i32, i32
  }
  func.func @transform_7(%arg0: i32) -> (i32, i32) {
    %c0_i32 = arith.constant 0 : i32
    %c0_i32_0 = arith.constant 0 : i32
    return %arg0, %c0_i32 : i32, i32
  }
}

</mosaic_0001>

<llo_original>
// kernel: tpu_custom_call.1
$region0: #{tpu_custom_call.1}
  #allocation0 [shape = 'u32[]', space=smem, size = 0x4, offset = 0x4, fixed_abs, tag = 'smem constant byte address 0x4 - core index']
  #allocation1 [shape = 'u32[144,128]{1,0:T(1,128)}', space=vmem, size = 0x12000, scoped, tag = 'internal scratch']
  %s0 = inlined_call_operand.vmem [shape: f32[64,128], index: 0, kind: input, shape index: {}]
  %s1 = inlined_call_operand.vmem [shape: f32[128,16], index: 1, kind: input, shape index: {}]
  %s2 = inlined_call_operand.vmem [shape: f32[1,16], index: 2, kind: input, shape index: {}]
  %s3 = inlined_call_operand.vmem [shape: f32[4,16], index: 3, kind: input, shape index: {}]
  %s4 = inlined_call_operand.vmem [shape: f32[16,128], index: 4, kind: input, shape index: {}]
  %s5 = inlined_call_operand.vmem [shape: f32[16,512], index: 5, kind: input, shape index: {}]
  %s6 = inlined_call_operand.hbm [shape: f32[512,128], index: 6, kind: input, shape index: {}]
  %s7 = inlined_call_operand.hbm [shape: f32[64,128], index: 7, kind: output, shape index: {}]
  %s8 = sld [smem:[#allocation0]]
  $region65: #{tpu_custom_call.1} parent=0
    _
  %s10 = ssub.s32 1, %s8
  %s11 = scalar_select 0, %s10, %s8
  $region1: #{tpu_custom_call.1} parent=0
    #allocation2 [shape = 'u8[262144]{0}', space=vmem, size = 0x40000, scoped, tag = 'input window, operand 6, single buffered']
    #allocation3 [shape = 's32[2]{0}', space=sflag, size = 0x8, scoped, tag = 'scoped memory for tpu_custom_call.1']
    #allocation4 [shape = 's32[2]{0}', space=sflag, size = 0x8, scoped, tag = 'scoped memory for tpu_custom_call.1']
    #allocation5 [shape = 'u8[32768]{0}', space=vmem, size = 0x8000, scoped, tag = 'output window, operand 0']
    %12 = vsyncpa [#allocation3], 0
    %13 = vsyncpa [#allocation4], 0
    %s14 = scalar_lea.sflag [#allocation4], 1
    %15 = vsyncpa %s14, 0
    loop: start=0, step=1, limit=4
    $region2: #{tpu_custom_call.1} parent=1 // loop_pre_header
      _
    $region3: #{tpu_custom_call.1} parent=1 // loop_header
      %s17 = sphi 0, %s21
      %p18 = scmp.ge.s32.totalorder %s17, 4
      %s27 = sphi 0, %s29
      %s30 = sphi 0, %s27
      %s31 = sphi 0, %s30
      %s47 = sphi 0, %s31
      %s51 = sphi 0, %s51
      %s53 = sphi 0, %s51
      %s54 = sphi 0, %s53
      %s68 = sphi 0, %s54
      %s72 = sphi 0, %s72
      %s74 = sphi 0, %s72
      %s75 = sphi 0, %s74
      %s89 = sphi 0, %s75
      %s93 = sphi 0, %s93
      %s95 = sphi 0, %s93
      %s96 = sphi 0, %s95
      %s110 = sphi 0, %s96
      %s114 = sphi 0, %s114
      %s116 = sphi 0, %s114
      %s117 = sphi 0, %s116
      %s131 = sphi 0, %s117
      %s135 = sphi 0, %s135
      %s137 = sphi 0, %s135
      %s138 = sphi 0, %s137
      %s152 = sphi 0, %s138
      %s156 = sphi 0, %s156
      %s158 = sphi 0, %s156
      %s159 = sphi 0, %s158
      %s173 = sphi 0, %s159
      %s179 = sphi 0, %s181
      %s182 = sphi 0, %s179
      %s183 = sphi 0, %s182
      %s199 = sphi 0, %s183
    $region4: #{tpu_custom_call.1} parent=1 // loop_header_branch
      %20 = sbr.rel (%p18) target = $region8
    $region5: #{tpu_custom_call.1} parent=1 // loop_body
      %s22 = ssub.s32 %s17, 1
      %s23 = ssub.s32 %s17, 2
      %s24 = sadd.s32 %s17, 1
      %s25 = ssub.s32 %s17, %s24
      %p26 = scmp.eq.s32.totalorder %s25, 0
      %s28 = sadd.s32 %s27, 1
      %s29 = scalar_select %p26, %s27, %s28
      %p32 = pneg %p26
      %p33 = scmp.eq.s32.totalorder %s17, 1
      %p34 = por %p32, %p33
      %p35 = scmp.ne.s32.totalorder %s27, %s30
      %p36 = scmp.eq.s32.totalorder %s17, 0
      %p37 = por %p35, %p36
      %p38 = scmp.ne.s32.totalorder %s27, %s30
      %p39 = scmp.eq.s32.totalorder %s22, 1
      %p40 = por %p38, %p39
      %p41 = scmp.ne.s32.totalorder %s30, %s31
      %p42 = scmp.eq.s32.totalorder %s22, 0
      %p43 = por %p41, %p42
      %p44 = scmp.ne.s32.totalorder %s30, %s31
      %p45 = scmp.eq.s32.totalorder %s23, 1
      %p46 = por %p44, %p45
      %p48 = scmp.ne.s32.totalorder %s31, %s47
      %p49 = scmp.eq.s32.totalorder %s23, 0
      %p50 = por %p48, %p49
      %s52 = sadd.s32 %s51, 1
      %p55 = scmp.eq.s32.totalorder %s17, 1
      %p56 = scmp.ne.s32.totalorder %s51, %s53
      %p57 = scmp.eq.s32.totalorder %s17, 0
      %p58 = por %p56, %p57
      %p59 = scmp.ne.s32.totalorder %s51, %s53
      %p60 = scmp.eq.s32.totalorder %s22, 1
      %p61 = por %p59, %p60
      %p62 = scmp.ne.s32.totalorder %s53, %s54
      %p63 = scmp.eq.s32.totalorder %s22, 0
      %p64 = por %p62, %p63
      %p65 = scmp.ne.s32.totalorder %s53, %s54
      %p66 = scmp.eq.s32.totalorder %s23, 1
      %p67 = por %p65, %p66
      %p69 = scmp.ne.s32.totalorder %s54, %s68
      %p70 = scmp.eq.s32.totalorder %s23, 0
      %p71 = por %p69, %p70
      %s73 = sadd.s32 %s72, 1
      %p76 = scmp.eq.s32.totalorder %s17, 1
      %p77 = scmp.ne.s32.totalorder %s72, %s74
      %p78 = scmp.eq.s32.totalorder %s17, 0
      %p79 = por %p77, %p78
      %p80 = scmp.ne.s32.totalorder %s72, %s74
      %p81 = scmp.eq.s32.totalorder %s22, 1
      %p82 = por %p80, %p81
      %p83 = scmp.ne.s32.totalorder %s74, %s75
      %p84 = scmp.eq.s32.totalorder %s22, 0
      %p85 = por %p83, %p84
      %p86 = scmp.ne.s32.totalorder %s74, %s75
      %p87 = scmp.eq.s32.totalorder %s23, 1
      %p88 = por %p86, %p87
      %p90 = scmp.ne.s32.totalorder %s75, %s89
      %p91 = scmp.eq.s32.totalorder %s23, 0
      %p92 = por %p90, %p91
      %s94 = sadd.s32 %s93, 1
      %p97 = scmp.eq.s32.totalorder %s17, 1
      %p98 = scmp.ne.s32.totalorder %s93, %s95
      %p99 = scmp.eq.s32.totalorder %s17, 0
      %p100 = por %p98, %p99
      %p101 = scmp.ne.s32.totalorder %s93, %s95
      %p102 = scmp.eq.s32.totalorder %s22, 1
      %p103 = por %p101, %p102
      %p104 = scmp.ne.s32.totalorder %s95, %s96
      %p105 = scmp.eq.s32.totalorder %s22, 0
      %p106 = por %p104, %p105
      %p107 = scmp.ne.s32.totalorder %s95, %s96
      %p108 = scmp.eq.s32.totalorder %s23, 1
      %p109 = por %p107, %p108
      %p111 = scmp.ne.s32.totalorder %s96, %s110
      %p112 = scmp.eq.s32.totalorder %s23, 0
      %p113 = por %p111, %p112
      %s115 = sadd.s32 %s114, 1
      %p118 = scmp.eq.s32.totalorder %s17, 1
      %p119 = scmp.ne.s32.totalorder %s114, %s116
      %p120 = scmp.eq.s32.totalorder %s17, 0
      %p121 = por %p119, %p120
      %p122 = scmp.ne.s32.totalorder %s114, %s116
      %p123 = scmp.eq.s32.totalorder %s22, 1
      %p124 = por %p122, %p123
      %p125 = scmp.ne.s32.totalorder %s116, %s117
      %p126 = scmp.eq.s32.totalorder %s22, 0
      %p127 = por %p125, %p126
      %p128 = scmp.ne.s32.totalorder %s116, %s117
      %p129 = scmp.eq.s32.totalorder %s23, 1
      %p130 = por %p128, %p129
      %p132 = scmp.ne.s32.totalorder %s117, %s131
      %p133 = scmp.eq.s32.totalorder %s23, 0
      %p134 = por %p132, %p133
      %s136 = sadd.s32 %s135, 1
      %p139 = scmp.eq.s32.totalorder %s17, 1
      %p140 = scmp.ne.s32.totalorder %s135, %s137
      %p141 = scmp.eq.s32.totalorder %s17, 0
      %p142 = por %p140, %p141
      %p143 = scmp.ne.s32.totalorder %s135, %s137
      %p144 = scmp.eq.s32.totalorder %s22, 1
      %p145 = por %p143, %p144
      %p146 = scmp.ne.s32.totalorder %s137, %s138
      %p147 = scmp.eq.s32.totalorder %s22, 0
      %p148 = por %p146, %p147
      %p149 = scmp.ne.s32.totalorder %s137, %s138
      %p150 = scmp.eq.s32.totalorder %s23, 1
      %p151 = por %p149, %p150
      %p153 = scmp.ne.s32.totalorder %s138, %s152
      %p154 = scmp.eq.s32.totalorder %s23, 0
      %p155 = por %p153, %p154
      %s157 = sadd.s32 %s156, 1
      %p160 = scmp.eq.s32.totalorder %s17, 1
      %p161 = scmp.ne.s32.totalorder %s156, %s158
      %p162 = scmp.eq.s32.totalorder %s17, 0
      %p163 = por %p161, %p162
      %p164 = scmp.ne.s32.totalorder %s156, %s158
      %p165 = scmp.eq.s32.totalorder %s22, 1
      %p166 = por %p164, %p165
      %p167 = scmp.ne.s32.totalorder %s158, %s159
      %p168 = scmp.eq.s32.totalorder %s22, 0
      %p169 = por %p167, %p168
      %p170 = scmp.ne.s32.totalorder %s158, %s159
      %p171 = scmp.eq.s32.totalorder %s23, 1
      %p172 = por %p170, %p171
      %p174 = scmp.ne.s32.totalorder %s159, %s173
      %p175 = scmp.eq.s32.totalorder %s23, 0
      %p176 = por %p174, %p175
      %s177 = ssub.s32 %s17, %s24
      %p178 = scmp.eq.s32.totalorder %s177, 0
      %s180 = sadd.s32 %s179, 1
      %s181 = scalar_select %p178, %s179, %s180
      %p184 = pneg %p178
      %p185 = scmp.eq.s32.totalorder %s17, 1
      %p186 = por %p184, %p185
      %p187 = scmp.ne.s32.totalorder %s179, %s182
      %p188 = scmp.eq.s32.totalorder %s17, 0
      %p189 = por %p187, %p188
      %p190 = scmp.ne.s32.totalorder %s179, %s182
      %p191 = scmp.eq.s32.totalorder %s22, 1
      %p192 = por %p190, %p191
      %p193 = scmp.ne.s32.totalorder %s182, %s183
      %p194 = scmp.eq.s32.totalorder %s22, 0
      %p195 = por %p193, %p194
      %p196 = scmp.ne.s32.totalorder %s182, %s183
      %p197 = scmp.eq.s32.totalorder %s23, 1
      %p198 = por %p196, %p197
      %p200 = scmp.ne.s32.totalorder %s183, %s199
      %p201 = scmp.eq.s32.totalorder %s23, 0
      %p202 = por %p200, %p201
      %p203 = scmp.le.s32.totalorder 1, %s17
      %p204 = scmp.lt.s32.totalorder %s17, 3
      %p205 = pnand %p203, %p204
      %p206 = pneg %p205
      // Predicated region
      $region9: #{tpu_custom_call.1} parent=5 // pred_check
        _
      $region10: #{tpu_custom_call.1} parent=5 // pred_check_branch
        %208 = sbr.rel (%p205) target = $region12
      $region11: #{tpu_custom_call.1} parent=5 // pred_region
        %s209 = ssub.s32 %s17, 1
        // Predicated region
        $region13: #{tpu_custom_call.1} parent=11 // pred_check
          %p210 = pneg %p64
        $region14: #{tpu_custom_call.1} parent=11 // pred_check_branch
          %212 = sbr.rel (%p210) target = $region16
        $region15: #{tpu_custom_call.1} parent=11 // pred_region
          _
        $region16: #{tpu_custom_call.1} parent=11 // pred_fallthru
          _
        // Predicated region
        $region17: #{tpu_custom_call.1} parent=11 // pred_check
          %p213 = pneg %p85
        $region18: #{tpu_custom_call.1} parent=11 // pred_check_branch
          %215 = sbr.rel (%p213) target = $region20
        $region19: #{tpu_custom_call.1} parent=11 // pred_region
          _
        $region20: #{tpu_custom_call.1} parent=11 // pred_fallthru
          _
        // Predicated region
        $region21: #{tpu_custom_call.1} parent=11 // pred_check
          %p216 = pneg %p106
        $region22: #{tpu_custom_call.1} parent=11 // pred_check_branch
          %218 = sbr.rel (%p216) target = $region24
        $region23: #{tpu_custom_call.1} parent=11 // pred_region
          _
        $region24: #{tpu_custom_call.1} parent=11 // pred_fallthru
          _
        // Predicated region
        $region25: #{tpu_custom_call.1} parent=11 // pred_check
          %p219 = pneg %p127
        $region26: #{tpu_custom_call.1} parent=11 // pred_check_branch
          %221 = sbr.rel (%p219) target = $region28
        $region27: #{tpu_custom_call.1} parent=11 // pred_region
          _
        $region28: #{tpu_custom_call.1} parent=11 // pred_fallthru
          _
        // Predicated region
        $region29: #{tpu_custom_call.1} parent=11 // pred_check
          %p222 = pneg %p148
        $region30: #{tpu_custom_call.1} parent=11 // pred_check_branch
          %224 = sbr.rel (%p222) target = $region32
        $region31: #{tpu_custom_call.1} parent=11 // pred_region
          _
        $region32: #{tpu_custom_call.1} parent=11 // pred_fallthru
          _
        // Predicated region
        $region33: #{tpu_custom_call.1} parent=11 // pred_check
          %p225 = pneg %p169
        $region34: #{tpu_custom_call.1} parent=11 // pred_check_branch
          %227 = sbr.rel (%p225) target = $region36
        $region35: #{tpu_custom_call.1} parent=11 // pred_region
          %s229 = ssub.s32 8192, 8192
          %230 = vsyncadd [#allocation3], %s229
          %s231 = sshll.u32 [#allocation2], 4
          %s232 = int_to_ptr.vmem [resolvable:$true] %s231
          %237 = dma.hbm_to_vmem [thread:$0]  %s6, 8192, %s232, [#allocation3], 128, 128, 8
        $region36: #{tpu_custom_call.1} parent=11 // pred_fallthru
          _
      $region12: #{tpu_custom_call.1} parent=5 // pred_fallthru
        _
      %p238 = scmp.lt.s32.totalorder %s17, 2
      // Predicated region
      $region37: #{tpu_custom_call.1} parent=5 // pred_check
        %p239 = pneg %p238
      $region38: #{tpu_custom_call.1} parent=5 // pred_check_branch
        %241 = sbr.rel (%p239) target = $region40
      $region39: #{tpu_custom_call.1} parent=5 // pred_region
        // Predicated region
        $region41: #{tpu_custom_call.1} parent=39 // pred_check
          %p242 = pneg %p37
        $region42: #{tpu_custom_call.1} parent=39 // pred_check_branch
          %244 = sbr.rel (%p242) target = $region44
        $region43: #{tpu_custom_call.1} parent=39 // pred_region
          %s245 = smul.u32 4, %s17
          %p246 = scmp.lt.s32.totalorder %s245, 7
          %s247 = scalar_select %p246, %s245, 7
          %s248 = smul.addr %s247, 8
          %s249 = scalar_lea.vmem %s0, %s248
          %s250 = smul.u32 4, %s17
        $region44: #{tpu_custom_call.1} parent=39 // pred_fallthru
          _
      $region40: #{tpu_custom_call.1} parent=5 // pred_fallthru
        _
      %p251 = scmp.le.s32.totalorder 1, %s17
      %p252 = scmp.lt.s32.totalorder %s17, 3
      %p253 = pnand %p251, %p252
      %p254 = pneg %p253
      // Predicated region
      $region45: #{tpu_custom_call.1} parent=5 // pred_check
        _
      $region46: #{tpu_custom_call.1} parent=5 // pred_check_branch
        %256 = sbr.rel (%p253) target = $region48
      $region47: #{tpu_custom_call.1} parent=5 // pred_region
        %s257 = ssub.s32 %s17, 1
        // Predicated region
        $region49: #{tpu_custom_call.1} parent=47 // pred_check
          %p258 = pneg %p169
        $region50: #{tpu_custom_call.1} parent=47 // pred_check_branch
          %260 = sbr.rel (%p258) target = $region52
        $region51: #{tpu_custom_call.1} parent=47 // pred_region
          %261 = dma.done [#allocation3], 8192
        $region52: #{tpu_custom_call.1} parent=47 // pred_fallthru
          _
        %s262 = smul.u32 4, %s22
        %p263 = scmp.lt.s32.totalorder %s262, 7
        %s264 = scalar_select %p263, %s262, 7
        %s265 = smul.addr %s264, 8
        %s266 = scalar_lea.vmem %s0, %s265
        %p267 = pneg %p43
        %p268 = pneg %p40
        %p269 = pneg %p64
        %p270 = pneg %p61
        %p271 = pneg %p85
        %p272 = pneg %p82
        %p273 = pneg %p106
        %p274 = pneg %p103
        %p275 = pneg %p127
        %p276 = pneg %p124
        %p277 = pneg %p148
        %p278 = pneg %p145
        %p279 = pneg %p169
        %p280 = pneg %p166
        %p281 = pneg %p195
        %p282 = pneg %p192
        %s283 = sand.u32 %s182, 1
        %s284 = scalar_lea.sflag [#allocation4], %s283
        %s285 = sand.u32 %s182, 1
        %s286 = smul.addr %s285, 32
        %s287 = scalar_lea.vmem [#allocation5], %s286
        %s288 = smul.u32 4, %s22
        %p289 = scmp.lt.s32.totalorder %s288, 7
        %s290 = scalar_select %p289, %s288, 7
        %s291 = smul.addr %s290, 8
        %s292 = scalar_lea.vmem %s0, %s291
        %s293 = smul.u32 4, %s22
        %s294 = smul.u32 4, %s22
        %v295 = vld [vmem:[%s292] sm:$0xff]
        %v296 = vld [vmem:[%s292 + $0x8] sm:$0xff]
        %v297 = vld [vmem:[%s292 + $0x10] sm:$0xff]
        %v298 = vld [vmem:[%s292 + $0x18] sm:$0xff]
        %v299 = vld [vmem:[%s1] sm:$0xff]
        %v300 = vld [vmem:[%s1 + $0x8] sm:$0xff]
        %v301 = vld [vmem:[%s1 + $0x10] sm:$0xff]
        %v302 = vld [vmem:[%s1 + $0x18] sm:$0xff]
        %v303 = vld [vmem:[%s1 + $0x20] sm:$0xff]
        %v304 = vld [vmem:[%s1 + $0x28] sm:$0xff]
        %v305 = vld [vmem:[%s1 + $0x30] sm:$0xff]
        %v306 = vld [vmem:[%s1 + $0x38] sm:$0xff]
        %v307 = vld [vmem:[%s1 + $0x40] sm:$0xff]
        %v308 = vld [vmem:[%s1 + $0x48] sm:$0xff]
        %v309 = vld [vmem:[%s1 + $0x50] sm:$0xff]
        %v310 = vld [vmem:[%s1 + $0x58] sm:$0xff]
        %v311 = vld [vmem:[%s1 + $0x60] sm:$0xff]
        %v312 = vld [vmem:[%s1 + $0x68] sm:$0xff]
        %v313 = vld [vmem:[%s1 + $0x70] sm:$0xff]
        %v314 = vld [vmem:[%s1 + $0x78] sm:$0xff]
        %v315 = vld [vmem:[%s2] sm:$0x1]
        %v317 = vlaneseq
        %v318 = vshrl.u32 %v317, 7
        %v319 = vsub.s32 0, %v318
        %v320 = vrot.slane %v315, %v319
        %322 = vmatprep.subr.mxu0 0.0
        %323 = vmatpush1.msra.mxu0 %v299
        %324 = vmatprep.subr.mxu0 0.0
        %325 = vmatpush1.msra.mxu0 %v300
        %326 = vmatprep.subr.mxu0 0.0
        %327 = vmatpush1.msra.mxu0 %v301
        %328 = vmatprep.subr.mxu0 0.0
        %329 = vmatpush1.msra.mxu0 %v302
        %330 = vmatprep.subr.mxu0 0.0
        %331 = vmatpush1.msra.mxu0 %v303
        %332 = vmatprep.subr.mxu0 0.0
        %333 = vmatpush1.msra.mxu0 %v304
        %334 = vmatprep.subr.mxu0 0.0
        %335 = vmatpush1.msra.mxu0 %v305
        %336 = vmatprep.subr.mxu0 0.0
        %337 = vmatpush1.msra.mxu0 %v306
        %338 = vmatprep.subr.mxu0 0.0
        %339 = vmatpush1.msra.mxu0 %v307
        %340 = vmatprep.subr.mxu0 0.0
        %341 = vmatpush1.msra.mxu0 %v308
        %342 = vmatprep.subr.mxu0 0.0
        %343 = vmatpush1.msra.mxu0 %v309
        %344 = vmatprep.subr.mxu0 0.0
        %345 = vmatpush1.msra.mxu0 %v310
        %346 = vmatprep.subr.mxu0 0.0
        %347 = vmatpush1.msra.mxu0 %v311
        %348 = vmatprep.subr.mxu0 0.0
        %349 = vmatpush1.msra.mxu0 %v312
        %350 = vmatprep.subr.mxu0 0.0
        %351 = vmatpush1.msra.mxu0 %v313
        %352 = vmatprep.subr.mxu0 0.0
        %353 = vmatpush1.msra.mxu0 %v314
        %354 = vmatprep.subr.mxu0 0.0
        %355 = vmatpush1.msra.mxu0 0.0
        %356 = vmatprep.subr.mxu0 0.0
        %357 = vmatpush1.msra.mxu0 0.0
        %358 = vmatprep.subr.mxu0 0.0
        %359 = vmatpush1.msra.mxu0 0.0
        %360 = vmatprep.subr.mxu0 0.0
        %361 = vmatpush1.msra.mxu0 0.0
        %362 = vmatprep.subr.mxu0 0.0
        %363 = vmatpush1.msra.mxu0 0.0
        %364 = vmatprep.subr.mxu0 0.0
        %365 = vmatpush1.msra.mxu0 0.0
        %366 = vmatprep.subr.mxu0 0.0
        %367 = vmatpush1.msra.mxu0 0.0
        %368 = vmatprep.subr.mxu0 0.0
        %369 = vmatpush1.msra.mxu0 0.0
        %370 = vmatprep.subr.mxu0 0.0
        %371 = vmatpush1.msra.mxu0 0.0
        %372 = vmatprep.subr.mxu0 0.0
        %373 = vmatpush1.msra.mxu0 0.0
        %374 = vmatprep.subr.mxu0 0.0
        %375 = vmatpush1.msra.mxu0 0.0
        %376 = vmatprep.subr.mxu0 0.0
        %377 = vmatpush1.msra.mxu0 0.0
        %378 = vmatprep.subr.mxu0 0.0
        %379 = vmatpush1.msra.mxu0 0.0
        %380 = vmatprep.subr.mxu0 0.0
        %381 = vmatpush1.msra.mxu0 0.0
        %382 = vmatprep.subr.mxu0 0.0
        %383 = vmatpush1.msra.mxu0 0.0
        %384 = vmatprep.subr.mxu0 0.0
        %385 = vmatpush1.msra.mxu0 0.0
        %386 = vmatprep.mubr.f32.mxu0 0.0
        %387 = vmatmul.mubr.f32.gmra.mrb[0].mxu0 %v295
        %v388 = vpop.f32.mrb[0].mxu0
        %v389 = vadd.f32 %v320, %v388
        %v390 = vpop.f32.mrb[0].mxu0
        %391 = vmatprep.mubr.f32.mxu0 0.0
        %392 = vmatmul.mubr.f32.gmra.mrb[0].mxu0 %v296
        %v393 = vpop.f32.mrb[0].mxu0
        %v394 = vadd.f32 %v320, %v393
        %v395 = vpop.f32.mrb[0].mxu0
        %396 = vmatprep.mubr.f32.mxu0 0.0
        %397 = vmatmul.mubr.f32.gmra.mrb[0].mxu0 %v297
        %v398 = vpop.f32.mrb[0].mxu0
        %v399 = vadd.f32 %v320, %v398
        %v400 = vpop.f32.mrb[0].mxu0
        %401 = vmatprep.mubr.f32.mxu0 0.0
        %402 = vmatmul.mubr.f32.gmra.mrb[0].mxu0 %v298
        %v403 = vpop.f32.mrb[0].mxu0
        %v404 = vadd.f32 %v320, %v403
        %v405 = vpop.f32.mrb[0].mxu0
        %406 = vdwg.mxu0
        %411 = vrot.lane.b32.xlu0 %v389, 124
        %v412 = vpop.permute.xlu0 %411
        %413 = vrot.lane.b32.xlu0 %v394, 124
        %v414 = vpop.permute.xlu0 %413
        %415 = vrot.lane.b32.xlu0 %v399, 124
        %v416 = vpop.permute.xlu0 %415
        %417 = vrot.lane.b32.xlu0 %v404, 124
        %v418 = vpop.permute.xlu0 %417
        %v423 = vmax.f32 %v389, %v412
        %v424 = vmax.f32 %v394, %v414
        %v425 = vmax.f32 %v399, %v416
        %v426 = vmax.f32 %v404, %v418
        %427 = vrot.lane.b32.xlu0 %v389, 120
        %v428 = vpop.permute.xlu0 %427
        %429 = vrot.lane.b32.xlu0 %v394, 120
        %v430 = vpop.permute.xlu0 %429
        %431 = vrot.lane.b32.xlu0 %v399, 120
        %v432 = vpop.permute.xlu0 %431
        %433 = vrot.lane.b32.xlu0 %v404, 120
        %v434 = vpop.permute.xlu0 %433
        %v439 = vmax.f32 %v423, %v428
        %v440 = vmax.f32 %v424, %v430
        %v441 = vmax.f32 %v425, %v432
        %v442 = vmax.f32 %v426, %v434
        %443 = vrot.lane.b32.xlu0 %v389, 116
        %v444 = vpop.permute.xlu0 %443
        %445 = vrot.lane.b32.xlu0 %v394, 116
        %v446 = vpop.permute.xlu0 %445
        %447 = vrot.lane.b32.xlu0 %v399, 116
        %v448 = vpop.permute.xlu0 %447
        %449 = vrot.lane.b32.xlu0 %v404, 116
        %v450 = vpop.permute.xlu0 %449
        %v455 = vmax.f32 %v439, %v444
        %v456 = vmax.f32 %v440, %v446
        %v457 = vmax.f32 %v441, %v448
        %v458 = vmax.f32 %v442, %v450
        %v459 = vld [vmem:[%s3] sm:$0xf]
        %vm460 = vcmask 31744
        %v462 = vsel %vm460, %v455, 0
        %v465 = vsel %vm460, %v456, 0
        %v468 = vsel %vm460, %v457, 0
        %v471 = vsel %vm460, %v458, 0
        %vm473 = vcmask 1043456
        %v475 = vsel %vm473, %v459, 0
        %477 = vmatprep.subr.mxu0 0.0
        %478 = vmatpush1.msra.mxu0 %v475
        %479 = vmatprep.subr.mxu0 0.0
        %480 = vmatpush1.msra.mxu0 0.0
        %481 = vmatprep.subr.mxu0 0.0
        %482 = vmatpush1.msra.mxu0 0.0
        %483 = vmatprep.subr.mxu0 0.0
        %484 = vmatpush1.msra.mxu0 0.0
        %485 = vmatprep.subr.mxu0 0.0
        %486 = vmatpush1.msra.mxu0 0.0
        %487 = vmatprep.subr.mxu0 0.0
        %488 = vmatpush1.msra.mxu0 0.0
        %489 = vmatprep.subr.mxu0 0.0
        %490 = vmatpush1.msra.mxu0 0.0
        %491 = vmatprep.subr.mxu0 0.0
        %492 = vmatpush1.msra.mxu0 0.0
        %493 = vmatprep.subr.mxu0 0.0
        %494 = vmatpush1.msra.mxu0 0.0
        %495 = vmatprep.subr.mxu0 0.0
        %496 = vmatpush1.msra.mxu0 0.0
        %497 = vmatprep.subr.mxu0 0.0
        %498 = vmatpush1.msra.mxu0 0.0
        %499 = vmatprep.subr.mxu0 0.0
        %500 = vmatpush1.msra.mxu0 0.0
        %501 = vmatprep.subr.mxu0 0.0
        %502 = vmatpush1.msra.mxu0 0.0
        %503 = vmatprep.subr.mxu0 0.0
        %504 = vmatpush1.msra.mxu0 0.0
        %505 = vmatprep.subr.mxu0 0.0
        %506 = vmatpush1.msra.mxu0 0.0
        %507 = vmatprep.subr.mxu0 0.0
        %508 = vmatpush1.msra.mxu0 0.0
        %509 = vmatprep.subr.mxu0 0.0
        %510 = vmatpush1.msra.mxu0 0.0
        %511 = vmatprep.subr.mxu0 0.0
        %512 = vmatpush1.msra.mxu0 0.0
        %513 = vmatprep.subr.mxu0 0.0
        %514 = vmatpush1.msra.mxu0 0.0
        %515 = vmatprep.subr.mxu0 0.0
        %516 = vmatpush1.msra.mxu0 0.0
        %517 = vmatprep.subr.mxu0 0.0
        %518 = vmatpush1.msra.mxu0 0.0
        %519 = vmatprep.subr.mxu0 0.0
        %520 = vmatpush1.msra.mxu0 0.0
        %521 = vmatprep.subr.mxu0 0.0
        %522 = vmatpush1.msra.mxu0 0.0
        %523 = vmatprep.subr.mxu0 0.0
        %524 = vmatpush1.msra.mxu0 0.0
        %525 = vmatprep.subr.mxu0 0.0
        %526 = vmatpush1.msra.mxu0 0.0
        %527 = vmatprep.subr.mxu0 0.0
        %528 = vmatpush1.msra.mxu0 0.0
        %529 = vmatprep.subr.mxu0 0.0
        %530 = vmatpush1.msra.mxu0 0.0
        %531 = vmatprep.subr.mxu0 0.0
        %532 = vmatpush1.msra.mxu0 0.0
        %533 = vmatprep.subr.mxu0 0.0
        %534 = vmatpush1.msra.mxu0 0.0
        %535 = vmatprep.subr.mxu0 0.0
        %536 = vmatpush1.msra.mxu0 0.0
        %537 = vmatprep.subr.mxu0 0.0
        %538 = vmatpush1.msra.mxu0 0.0
        %539 = vmatprep.subr.mxu0 0.0
        %540 = vmatpush1.msra.mxu0 0.0
        %541 = vmatprep.mubr.f32.mxu0 0.0
        %542 = vmatmul.mubr.f32.gmra.mrb[0].mxu0 %v462
        %v543 = vpop.f32.mrb[0].mxu0
        %v544 = vadd.f32 0.0, %v543
        %v545 = vpop.f32.mrb[0].mxu0
        %546 = vmatprep.mubr.f32.mxu0 0.0
        %547 = vmatmul.mubr.f32.gmra.mrb[0].mxu0 %v465
        %v548 = vpop.f32.mrb[0].mxu0
        %v549 = vadd.f32 0.0, %v548
        %v550 = vpop.f32.mrb[0].mxu0
        %551 = vmatprep.mubr.f32.mxu0 0.0
        %552 = vmatmul.mubr.f32.gmra.mrb[0].mxu0 %v468
        %v553 = vpop.f32.mrb[0].mxu0
        %v554 = vadd.f32 0.0, %v553
        %v555 = vpop.f32.mrb[0].mxu0
        %556 = vmatprep.mubr.f32.mxu0 0.0
        %557 = vmatmul.mubr.f32.gmra.mrb[0].mxu0 %v471
        %v558 = vpop.f32.mrb[0].mxu0
        %v559 = vadd.f32 0.0, %v558
        %v560 = vpop.f32.mrb[0].mxu0
        %561 = vdwg.mxu0
        %v562 = vsub.f32 %v389, %v544
        %v563 = vsub.f32 %v394, %v549
        %v564 = vsub.f32 %v399, %v554
        %v565 = vsub.f32 %v404, %v559
        %v566 = vmul.f32 %v562, 1.442695
        %v567 = vpow.pop %v566
        %v568 = vmul.f32 %v563, 1.442695
        %v569 = vpow.pop %v568
        %v570 = vmul.f32 %v564, 1.442695
        %v571 = vpow.pop %v570
        %v572 = vmul.f32 %v565, 1.442695
        %v573 = vpow.pop %v572
        %v574 = vld [vmem:[%s4] sm:$0xff]
        %v575 = vld [vmem:[%s4 + $0x8] sm:$0xff]
        %vm576 = vcmask 130048
        %v578 = vsel %vm576, %v567, 0
        %v581 = vsel %vm576, %v569, 0
        %v584 = vsel %vm576, %v571, 0
        %v587 = vsel %vm576, %v573, 0
        %589 = vmatprep.subr.mxu0 0.0
        %590 = vmatpush1.msra.mxu0 %v574
        %591 = vmatprep.subr.mxu0 0.0
        %592 = vmatpush1.msra.mxu0 %v575
        %593 = vmatprep.subr.mxu0 0.0
        %594 = vmatpush1.msra.mxu0 0.0
        %595 = vmatprep.subr.mxu0 0.0
        %596 = vmatpush1.msra.mxu0 0.0
        %597 = vmatprep.subr.mxu0 0.0
        %598 = vmatpush1.msra.mxu0 0.0
        %599 = vmatprep.subr.mxu0 0.0
        %600 = vmatpush1.msra.mxu0 0.0
        %601 = vmatprep.subr.mxu0 0.0
        %602 = vmatpush1.msra.mxu0 0.0
        %603 = vmatprep.subr.mxu0 0.0
        %604 = vmatpush1.msra.mxu0 0.0
        %605 = vmatprep.subr.mxu0 0.0
        %606 = vmatpush1.msra.mxu0 0.0
        %607 = vmatprep.subr.mxu0 0.0
        %608 = vmatpush1.msra.mxu0 0.0
        %609 = vmatprep.subr.mxu0 0.0
        %610 = vmatpush1.msra.mxu0 0.0
        %611 = vmatprep.subr.mxu0 0.0
        %612 = vmatpush1.msra.mxu0 0.0
        %613 = vmatprep.subr.mxu0 0.0
        %614 = vmatpush1.msra.mxu0 0.0
        %615 = vmatprep.subr.mxu0 0.0
        %616 = vmatpush1.msra.mxu0 0.0
        %617 = vmatprep.subr.mxu0 0.0
        %618 = vmatpush1.msra.mxu0 0.0
        %619 = vmatprep.subr.mxu0 0.0
        %620 = vmatpush1.msra.mxu0 0.0
        %621 = vmatprep.subr.mxu0 0.0
        %622 = vmatpush1.msra.mxu0 0.0
        %623 = vmatprep.subr.mxu0 0.0
        %624 = vmatpush1.msra.mxu0 0.0
        %625 = vmatprep.subr.mxu0 0.0
        %626 = vmatpush1.msra.mxu0 0.0
        %627 = vmatprep.subr.mxu0 0.0
        %628 = vmatpush1.msra.mxu0 0.0
        %629 = vmatprep.subr.mxu0 0.0
        %630 = vmatpush1.msra.mxu0 0.0
        %631 = vmatprep.subr.mxu0 0.0
        %632 = vmatpush1.msra.mxu0 0.0
        %633 = vmatprep.subr.mxu0 0.0
        %634 = vmatpush1.msra.mxu0 0.0
        %635 = vmatprep.subr.mxu0 0.0
        %636 = vmatpush1.msra.mxu0 0.0
        %637 = vmatprep.subr.mxu0 0.0
        %638 = vmatpush1.msra.mxu0 0.0
        %639 = vmatprep.subr.mxu0 0.0
        %640 = vmatpush1.msra.mxu0 0.0
        %641 = vmatprep.subr.mxu0 0.0
        %642 = vmatpush1.msra.mxu0 0.0
        %643 = vmatprep.subr.mxu0 0.0
        %644 = vmatpush1.msra.mxu0 0.0
        %645 = vmatprep.subr.mxu0 0.0
        %646 = vmatpush1.msra.mxu0 0.0
        %647 = vmatprep.subr.mxu0 0.0
        %648 = vmatpush1.msra.mxu0 0.0
        %649 = vmatprep.subr.mxu0 0.0
        %650 = vmatpush1.msra.mxu0 0.0
        %651 = vmatprep.subr.mxu0 0.0
        %652 = vmatpush1.msra.mxu0 0.0
        %653 = vmatprep.mubr.f32.mxu0 0.0
        %654 = vmatmul.mubr.f32.gmra.mrb[0].mxu0 %v578
        %v655 = vpop.f32.mrb[0].mxu0
        %v656 = vadd.f32 0.0, %v655
        %v657 = vpop.f32.mrb[0].mxu0
        %658 = vmatprep.mubr.f32.mxu0 0.0
        %659 = vmatmul.mubr.f32.gmra.mrb[0].mxu0 %v581
        %v660 = vpop.f32.mrb[0].mxu0
        %v661 = vadd.f32 0.0, %v660
        %v662 = vpop.f32.mrb[0].mxu0
        %663 = vmatprep.mubr.f32.mxu0 0.0
        %664 = vmatmul.mubr.f32.gmra.mrb[0].mxu0 %v584
        %v665 = vpop.f32.mrb[0].mxu0
        %v666 = vadd.f32 0.0, %v665
        %v667 = vpop.f32.mrb[0].mxu0
        %668 = vmatprep.mubr.f32.mxu0 0.0
        %669 = vmatmul.mubr.f32.gmra.mrb[0].mxu0 %v587
        %v670 = vpop.f32.mrb[0].mxu0
        %v671 = vadd.f32 0.0, %v670
        %v672 = vpop.f32.mrb[0].mxu0
        %673 = vdwg.mxu0
        %v674 = vld [vmem:[%s5] sm:$0xff]
        %v675 = vld [vmem:[%s5 + $0x8] sm:$0xff]
        %v676 = vld [vmem:[%s5 + $0x10] sm:$0xff]
        %v677 = vld [vmem:[%s5 + $0x18] sm:$0xff]
        %v678 = vld [vmem:[%s5 + $0x20] sm:$0xff]
        %v679 = vld [vmem:[%s5 + $0x28] sm:$0xff]
        %v680 = vld [vmem:[%s5 + $0x30] sm:$0xff]
        %v681 = vld [vmem:[%s5 + $0x38] sm:$0xff]
        %682 = vmatprep.subr.mxu0 %v675
        %683 = vmatpush1.msra.mxu0 %v674
        %684 = vmatprep.subr.mxu0 %v679
        %685 = vmatpush1.msra.mxu0 %v678
        %686 = vmatprep.subr.mxu0 0.0
        %687 = vmatpush1.msra.mxu0 0.0
        %688 = vmatprep.subr.mxu0 0.0
        %689 = vmatpush1.msra.mxu0 0.0
        %690 = vmatprep.subr.mxu0 0.0
        %691 = vmatpush1.msra.mxu0 0.0
        %692 = vmatprep.subr.mxu0 0.0
        %693 = vmatpush1.msra.mxu0 0.0
        %694 = vmatprep.subr.mxu0 0.0
        %695 = vmatpush1.msra.mxu0 0.0
        %696 = vmatprep.subr.mxu0 0.0
        %697 = vmatpush1.msra.mxu0 0.0
        %698 = vmatprep.subr.mxu0 0.0
        %699 = vmatpush1.msra.mxu0 0.0
        %700 = vmatprep.subr.mxu0 0.0
        %701 = vmatpush1.msra.mxu0 0.0
        %702 = vmatprep.subr.mxu0 0.0
        %703 = vmatpush1.msra.mxu0 0.0
        %704 = vmatprep.subr.mxu0 0.0
        %705 = vmatpush1.msra.mxu0 0.0
        %706 = vmatprep.subr.mxu0 0.0
        %707 = vmatpush1.msra.mxu0 0.0
        %708 = vmatprep.subr.mxu0 0.0
        %709 = vmatpush1.msra.mxu0 0.0
        %710 = vmatprep.subr.mxu0 0.0
        %711 = vmatpush1.msra.mxu0 0.0
        %712 = vmatprep.subr.mxu0 0.0
        %713 = vmatpush1.msra.mxu0 0.0
        %714 = vmatprep.subr.mxu0 0.0
        %715 = vmatpush1.msra.mxu0 0.0
        %716 = vmatprep.subr.mxu0 0.0
        %717 = vmatpush1.msra.mxu0 0.0
        %718 = vmatprep.subr.mxu0 0.0
        %719 = vmatpush1.msra.mxu0 0.0
        %720 = vmatprep.subr.mxu0 0.0
        %721 = vmatpush1.msra.mxu0 0.0
        %722 = vmatprep.subr.mxu0 0.0
        %723 = vmatpush1.msra.mxu0 0.0
        %724 = vmatprep.subr.mxu0 0.0
        %725 = vmatpush1.msra.mxu0 0.0
        %726 = vmatprep.subr.mxu0 0.0
        %727 = vmatpush1.msra.mxu0 0.0
        %728 = vmatprep.subr.mxu0 0.0
        %729 = vmatpush1.msra.mxu0 0.0
        %730 = vmatprep.subr.mxu0 0.0
        %731 = vmatpush1.msra.mxu0 0.0
        %732 = vmatprep.subr.mxu0 0.0
        %733 = vmatpush1.msra.mxu0 0.0
        %734 = vmatprep.subr.mxu0 0.0
        %735 = vmatpush1.msra.mxu0 0.0
        %736 = vmatprep.subr.mxu0 0.0
        %737 = vmatpush1.msra.mxu0 0.0
        %738 = vmatprep.subr.mxu0 0.0
        %739 = vmatpush1.msra.mxu0 0.0
        %740 = vmatprep.subr.mxu0 0.0
        %741 = vmatpush1.msra.mxu0 0.0
        %742 = vmatprep.subr.mxu0 0.0
        %743 = vmatpush1.msra.mxu0 0.0
        %744 = vmatprep.subr.mxu0 0.0
        %745 = vmatpush1.msra.mxu0 0.0
        %746 = vmatprep.mubr.f32.mxu0 0.0
        %747 = vmatmul.mubr.f32.gmra.mrb[0].mxu0 %v578
        %v748 = vpop.f32.mrb[0].mxu0
        %v749 = vadd.f32 0.0, %v748
        %v750 = vpop.f32.mrb[0].mxu0
        %v751 = vadd.f32 0.0, %v750
        %752 = vmatprep.mubr.f32.mxu0 0.0
        %753 = vmatmul.mubr.f32.gmra.mrb[0].mxu0 %v581
        %v754 = vpop.f32.mrb[0].mxu0
        %v755 = vadd.f32 0.0, %v754
        %v756 = vpop.f32.mrb[0].mxu0
        %v757 = vadd.f32 0.0, %v756
        %758 = vmatprep.mubr.f32.mxu0 0.0
        %759 = vmatmul.mubr.f32.gmra.mrb[0].mxu0 %v584
        %v760 = vpop.f32.mrb[0].mxu0
        %v761 = vadd.f32 0.0, %v760
        %v762 = vpop.f32.mrb[0].mxu0
        %v763 = vadd.f32 0.0, %v762
        %764 = vmatprep.mubr.f32.mxu0 0.0
        %765 = vmatmul.mubr.f32.gmra.mrb[0].mxu0 %v587
        %v766 = vpop.f32.mrb[0].mxu0
        %v767 = vadd.f32 0.0, %v766
        %v768 = vpop.f32.mrb[0].mxu0
        %v769 = vadd.f32 0.0, %v768
        %770 = vdwg.mxu0
        %771 = vmatprep.subr.mxu0 %v677
        %772 = vmatpush1.msra.mxu0 %v676
        %773 = vmatprep.subr.mxu0 %v681
        %774 = vmatpush1.msra.mxu0 %v680
        %775 = vmatprep.subr.mxu0 0.0
        %776 = vmatpush1.msra.mxu0 0.0
        %777 = vmatprep.subr.mxu0 0.0
        %778 = vmatpush1.msra.mxu0 0.0
        %779 = vmatprep.subr.mxu0 0.0
        %780 = vmatpush1.msra.mxu0 0.0
        %781 = vmatprep.subr.mxu0 0.0
        %782 = vmatpush1.msra.mxu0 0.0
        %783 = vmatprep.subr.mxu0 0.0
        %784 = vmatpush1.msra.mxu0 0.0
        %785 = vmatprep.subr.mxu0 0.0
        %786 = vmatpush1.msra.mxu0 0.0
        %787 = vmatprep.subr.mxu0 0.0
        %788 = vmatpush1.msra.mxu0 0.0
        %789 = vmatprep.subr.mxu0 0.0
        %790 = vmatpush1.msra.mxu0 0.0
        %791 = vmatprep.subr.mxu0 0.0
        %792 = vmatpush1.msra.mxu0 0.0
        %793 = vmatprep.subr.mxu0 0.0
        %794 = vmatpush1.msra.mxu0 0.0
        %795 = vmatprep.subr.mxu0 0.0
        %796 = vmatpush1.msra.mxu0 0.0
        %797 = vmatprep.subr.mxu0 0.0
        %798 = vmatpush1.msra.mxu0 0.0
        %799 = vmatprep.subr.mxu0 0.0
        %800 = vmatpush1.msra.mxu0 0.0
        %801 = vmatprep.subr.mxu0 0.0
        %802 = vmatpush1.msra.mxu0 0.0
        %803 = vmatprep.subr.mxu0 0.0
        %804 = vmatpush1.msra.mxu0 0.0
        %805 = vmatprep.subr.mxu0 0.0
        %806 = vmatpush1.msra.mxu0 0.0
        %807 = vmatprep.subr.mxu0 0.0
        %808 = vmatpush1.msra.mxu0 0.0
        %809 = vmatprep.subr.mxu0 0.0
        %810 = vmatpush1.msra.mxu0 0.0
        %811 = vmatprep.subr.mxu0 0.0
        %812 = vmatpush1.msra.mxu0 0.0
        %813 = vmatprep.subr.mxu0 0.0
        %814 = vmatpush1.msra.mxu0 0.0
        %815 = vmatprep.subr.mxu0 0.0
        %816 = vmatpush1.msra.mxu0 0.0
        %817 = vmatprep.subr.mxu0 0.0
        %818 = vmatpush1.msra.mxu0 0.0
        %819 = vmatprep.subr.mxu0 0.0
        %820 = vmatpush1.msra.mxu0 0.0
        %821 = vmatprep.subr.mxu0 0.0
        %822 = vmatpush1.msra.mxu0 0.0
        %823 = vmatprep.subr.mxu0 0.0
        %824 = vmatpush1.msra.mxu0 0.0
        %825 = vmatprep.subr.mxu0 0.0
        %826 = vmatpush1.msra.mxu0 0.0
        %827 = vmatprep.subr.mxu0 0.0
        %828 = vmatpush1.msra.mxu0 0.0
        %829 = vmatprep.subr.mxu0 0.0
        %830 = vmatpush1.msra.mxu0 0.0
        %831 = vmatprep.subr.mxu0 0.0
        %832 = vmatpush1.msra.mxu0 0.0
        %833 = vmatprep.subr.mxu0 0.0
        %834 = vmatpush1.msra.mxu0 0.0
        %835 = vmatprep.mubr.f32.mxu0 0.0
        %836 = vmatmul.mubr.f32.gmra.mrb[0].mxu0 %v578
        %v837 = vpop.f32.mrb[0].mxu0
        %v838 = vadd.f32 0.0, %v837
        %v839 = vpop.f32.mrb[0].mxu0
        %v840 = vadd.f32 0.0, %v839
        %841 = vmatprep.mubr.f32.mxu0 0.0
        %842 = vmatmul.mubr.f32.gmra.mrb[0].mxu0 %v581
        %v843 = vpop.f32.mrb[0].mxu0
        %v844 = vadd.f32 0.0, %v843
        %v845 = vpop.f32.mrb[0].mxu0
        %v846 = vadd.f32 0.0, %v845
        %847 = vmatprep.mubr.f32.mxu0 0.0
        %848 = vmatmul.mubr.f32.gmra.mrb[0].mxu0 %v584
        %v849 = vpop.f32.mrb[0].mxu0
        %v850 = vadd.f32 0.0, %v849
        %v851 = vpop.f32.mrb[0].mxu0
        %v852 = vadd.f32 0.0, %v851
        %853 = vmatprep.mubr.f32.mxu0 0.0
        %854 = vmatmul.mubr.f32.gmra.mrb[0].mxu0 %v587
        %v855 = vpop.f32.mrb[0].mxu0
        %v856 = vadd.f32 0.0, %v855
        %v857 = vpop.f32.mrb[0].mxu0
        %v858 = vadd.f32 0.0, %v857
        %859 = vdwg.mxu0
        %v860 = vmul.f32 %v749, %v295
        %v861 = vmul.f32 %v751, %v295
        %v862 = vmul.f32 %v838, %v295
        %v863 = vmul.f32 %v840, %v295
        %v864 = vmul.f32 %v755, %v296
        %v865 = vmul.f32 %v757, %v296
        %v866 = vmul.f32 %v844, %v296
        %v867 = vmul.f32 %v846, %v296
        %v868 = vmul.f32 %v761, %v297
        %v869 = vmul.f32 %v763, %v297
        %v870 = vmul.f32 %v850, %v297
        %v871 = vmul.f32 %v852, %v297
        %v872 = vmul.f32 %v767, %v298
        %v873 = vmul.f32 %v769, %v298
        %v874 = vmul.f32 %v856, %v298
        %v875 = vmul.f32 %v858, %v298
        %v876 = vld [vmem:[#allocation2] sm:$0xff]
        %v877 = vld [vmem:[#allocation2 + $0x8] sm:$0xff]
        %v878 = vld [vmem:[#allocation2 + $0x10] sm:$0xff]
        %v879 = vld [vmem:[#allocation2 + $0x18] sm:$0xff]
        %v880 = vld [vmem:[#allocation2 + $0x20] sm:$0xff]
        %v881 = vld [vmem:[#allocation2 + $0x28] sm:$0xff]
        %v882 = vld [vmem:[#allocation2 + $0x30] sm:$0xff]
        %v883 = vld [vmem:[#allocation2 + $0x38] sm:$0xff]
        %v884 = vld [vmem:[#allocation2 + $0x40] sm:$0xff]
        %v885 = vld [vmem:[#allocation2 + $0x48] sm:$0xff]
        %v886 = vld [vmem:[#allocation2 + $0x50] sm:$0xff]
        %v887 = vld [vmem:[#allocation2 + $0x58] sm:$0xff]
        %v888 = vld [vmem:[#allocation2 + $0x60] sm:$0xff]
        %v889 = vld [vmem:[#allocation2 + $0x68] sm:$0xff]
        %v890 = vld [vmem:[#allocation2 + $0x70] sm:$0xff]
        %v891 = vld [vmem:[#allocation2 + $0x78] sm:$0xff]
        %v892 = vld [vmem:[#allocation2 + $0x80] sm:$0xff]
        %v893 = vld [vmem:[#allocation2 + $0x88] sm:$0xff]
        %v894 = vld [vmem:[#allocation2 + $0x90] sm:$0xff]
        %v895 = vld [vmem:[#allocation2 + $0x98] sm:$0xff]
        %v896 = vld [vmem:[#allocation2 + $0xa0] sm:$0xff]
        %v897 = vld [vmem:[#allocation2 + $0xa8] sm:$0xff]
        %v898 = vld [vmem:[#allocation2 + $0xb0] sm:$0xff]
        %v899 = vld [vmem:[#allocation2 + $0xb8] sm:$0xff]
        %v900 = vld [vmem:[#allocation2 + $0xc0] sm:$0xff]
        %v901 = vld [vmem:[#allocation2 + $0xc8] sm:$0xff]
        %v902 = vld [vmem:[#allocation2 + $0xd0] sm:$0xff]
        %v903 = vld [vmem:[#allocation2 + $0xd8] sm:$0xff]
        %v904 = vld [vmem:[#allocation2 + $0xe0] sm:$0xff]
        %v905 = vld [vmem:[#allocation2 + $0xe8] sm:$0xff]
        %v906 = vld [vmem:[#allocation2 + $0xf0] sm:$0xff]
        %v907 = vld [vmem:[#allocation2 + $0xf8] sm:$0xff]
        %v908 = vld [vmem:[#allocation2 + $0x100] sm:$0xff]
        %v909 = vld [vmem:[#allocation2 + $0x108] sm:$0xff]
        %v910 = vld [vmem:[#allocation2 + $0x110] sm:$0xff]
        %v911 = vld [vmem:[#allocation2 + $0x118] sm:$0xff]
        %v912 = vld [vmem:[#allocation2 + $0x120] sm:$0xff]
        %v913 = vld [vmem:[#allocation2 + $0x128] sm:$0xff]
        %v914 = vld [vmem:[#allocation2 + $0x130] sm:$0xff]
        %v915 = vld [vmem:[#allocation2 + $0x138] sm:$0xff]
        %v916 = vld [vmem:[#allocation2 + $0x140] sm:$0xff]
        %v917 = vld [vmem:[#allocation2 + $0x148] sm:$0xff]
        %v918 = vld [vmem:[#allocation2 + $0x150] sm:$0xff]
        %v919 = vld [vmem:[#allocation2 + $0x158] sm:$0xff]
        %v920 = vld [vmem:[#allocation2 + $0x160] sm:$0xff]
        %v921 = vld [vmem:[#allocation2 + $0x168] sm:$0xff]
        %v922 = vld [vmem:[#allocation2 + $0x170] sm:$0xff]
        %v923 = vld [vmem:[#allocation2 + $0x178] sm:$0xff]
        %v924 = vld [vmem:[#allocation2 + $0x180] sm:$0xff]
        %v925 = vld [vmem:[#allocation2 + $0x188] sm:$0xff]
        %v926 = vld [vmem:[#allocation2 + $0x190] sm:$0xff]
        %v927 = vld [vmem:[#allocation2 + $0x198] sm:$0xff]
        %v928 = vld [vmem:[#allocation2 + $0x1a0] sm:$0xff]
        %v929 = vld [vmem:[#allocation2 + $0x1a8] sm:$0xff]
        %v930 = vld [vmem:[#allocation2 + $0x1b0] sm:$0xff]
        %v931 = vld [vmem:[#allocation2 + $0x1b8] sm:$0xff]
        %v932 = vld [vmem:[#allocation2 + $0x1c0] sm:$0xff]
        %v933 = vld [vmem:[#allocation2 + $0x1c8] sm:$0xff]
        %v934 = vld [vmem:[#allocation2 + $0x1d0] sm:$0xff]
        %v935 = vld [vmem:[#allocation2 + $0x1d8] sm:$0xff]
        %v936 = vld [vmem:[#allocation2 + $0x1e0] sm:$0xff]
        %v937 = vld [vmem:[#allocation2 + $0x1e8] sm:$0xff]
        %v938 = vld [vmem:[#allocation2 + $0x1f0] sm:$0xff]
        %v939 = vld [vmem:[#allocation2 + $0x1f8] sm:$0xff]
        %940 = vmatprep.subr.mxu0 0.0
        %941 = vmatpush1.msra.mxu0 %v876
        %942 = vmatprep.subr.mxu0 0.0
        %943 = vmatpush1.msra.mxu0 %v877
        %944 = vmatprep.subr.mxu0 0.0
        %945 = vmatpush1.msra.mxu0 %v878
        %946 = vmatprep.subr.mxu0 0.0
        %947 = vmatpush1.msra.mxu0 %v879
        %948 = vmatprep.subr.mxu0 0.0
        %949 = vmatpush1.msra.mxu0 %v880
        %950 = vmatprep.subr.mxu0 0.0
        %951 = vmatpush1.msra.mxu0 %v881
        %952 = vmatprep.subr.mxu0 0.0
        %953 = vmatpush1.msra.mxu0 %v882
        %954 = vmatprep.subr.mxu0 0.0
        %955 = vmatpush1.msra.mxu0 %v883
        %956 = vmatprep.subr.mxu0 0.0
        %957 = vmatpush1.msra.mxu0 %v884
        %958 = vmatprep.subr.mxu0 0.0
        %959 = vmatpush1.msra.mxu0 %v885
        %960 = vmatprep.subr.mxu0 0.0
        %961 = vmatpush1.msra.mxu0 %v886
        %962 = vmatprep.subr.mxu0 0.0
        %963 = vmatpush1.msra.mxu0 %v887
        %964 = vmatprep.subr.mxu0 0.0
        %965 = vmatpush1.msra.mxu0 %v888
        %966 = vmatprep.subr.mxu0 0.0
        %967 = vmatpush1.msra.mxu0 %v889
        %968 = vmatprep.subr.mxu0 0.0
        %969 = vmatpush1.msra.mxu0 %v890
        %970 = vmatprep.subr.mxu0 0.0
        %971 = vmatpush1.msra.mxu0 %v891
        %972 = vmatprep.subr.mxu0 0.0
        %973 = vmatpush1.msra.mxu0 %v892
        %974 = vmatprep.subr.mxu0 0.0
        %975 = vmatpush1.msra.mxu0 %v893
        %976 = vmatprep.subr.mxu0 0.0
        %977 = vmatpush1.msra.mxu0 %v894
        %978 = vmatprep.subr.mxu0 0.0
        %979 = vmatpush1.msra.mxu0 %v895
        %980 = vmatprep.subr.mxu0 0.0
        %981 = vmatpush1.msra.mxu0 %v896
        %982 = vmatprep.subr.mxu0 0.0
        %983 = vmatpush1.msra.mxu0 %v897
        %984 = vmatprep.subr.mxu0 0.0
        %985 = vmatpush1.msra.mxu0 %v898
        %986 = vmatprep.subr.mxu0 0.0
        %987 = vmatpush1.msra.mxu0 %v899
        %988 = vmatprep.subr.mxu0 0.0
        %989 = vmatpush1.msra.mxu0 %v900
        %990 = vmatprep.subr.mxu0 0.0
        %991 = vmatpush1.msra.mxu0 %v901
        %992 = vmatprep.subr.mxu0 0.0
        %993 = vmatpush1.msra.mxu0 %v902
        %994 = vmatprep.subr.mxu0 0.0
        %995 = vmatpush1.msra.mxu0 %v903
        %996 = vmatprep.subr.mxu0 0.0
        %997 = vmatpush1.msra.mxu0 %v904
        %998 = vmatprep.subr.mxu0 0.0
        %999 = vmatpush1.msra.mxu0 %v905
        %1000 = vmatprep.subr.mxu0 0.0
        %1001 = vmatpush1.msra.mxu0 %v906
        %1002 = vmatprep.subr.mxu0 0.0
        %1003 = vmatpush1.msra.mxu0 %v907
        %1004 = vmatprep.mubr.f32.mxu0 %v861
        %1005 = vmatmul.mubr.f32.gmra.mrb[0].mxu0 %v860
        %v1006 = vpop.f32.mrb[0].mxu0
        %v1007 = vadd.f32 0.0, %v1006
        %v1008 = vpop.f32.mrb[0].mxu0
        %1009 = vmatprep.mubr.f32.mxu0 %v865
        %1010 = vmatmul.mubr.f32.gmra.mrb[0].mxu0 %v864
        %v1011 = vpop.f32.mrb[0].mxu0
        %v1012 = vadd.f32 0.0, %v1011
        %v1013 = vpop.f32.mrb[0].mxu0
        %1014 = vmatprep.mubr.f32.mxu0 %v869
        %1015 = vmatmul.mubr.f32.gmra.mrb[0].mxu0 %v868
        %v1016 = vpop.f32.mrb[0].mxu0
        %v1017 = vadd.f32 0.0, %v1016
        %v1018 = vpop.f32.mrb[0].mxu0
        %1019 = vmatprep.mubr.f32.mxu0 %v873
        %1020 = vmatmul.mubr.f32.gmra.mrb[0].mxu0 %v872
        %v1021 = vpop.f32.mrb[0].mxu0
        %v1022 = vadd.f32 0.0, %v1021
        %v1023 = vpop.f32.mrb[0].mxu0
        %1024 = vdwg.mxu0
        %1025 = vmatprep.subr.mxu0 0.0
        %1026 = vmatpush1.msra.mxu0 %v908
        %1027 = vmatprep.subr.mxu0 0.0
        %1028 = vmatpush1.msra.mxu0 %v909
        %1029 = vmatprep.subr.mxu0 0.0
        %1030 = vmatpush1.msra.mxu0 %v910
        %1031 = vmatprep.subr.mxu0 0.0
        %1032 = vmatpush1.msra.mxu0 %v911
        %1033 = vmatprep.subr.mxu0 0.0
        %1034 = vmatpush1.msra.mxu0 %v912
        %1035 = vmatprep.subr.mxu0 0.0
        %1036 = vmatpush1.msra.mxu0 %v913
        %1037 = vmatprep.subr.mxu0 0.0
        %1038 = vmatpush1.msra.mxu0 %v914
        %1039 = vmatprep.subr.mxu0 0.0
        %1040 = vmatpush1.msra.mxu0 %v915
        %1041 = vmatprep.subr.mxu0 0.0
        %1042 = vmatpush1.msra.mxu0 %v916
        %1043 = vmatprep.subr.mxu0 0.0
        %1044 = vmatpush1.msra.mxu0 %v917
        %1045 = vmatprep.subr.mxu0 0.0
        %1046 = vmatpush1.msra.mxu0 %v918
        %1047 = vmatprep.subr.mxu0 0.0
        %1048 = vmatpush1.msra.mxu0 %v919
        %1049 = vmatprep.subr.mxu0 0.0
        %1050 = vmatpush1.msra.mxu0 %v920
        %1051 = vmatprep.subr.mxu0 0.0
        %1052 = vmatpush1.msra.mxu0 %v921
        %1053 = vmatprep.subr.mxu0 0.0
        %1054 = vmatpush1.msra.mxu0 %v922
        %1055 = vmatprep.subr.mxu0 0.0
        %1056 = vmatpush1.msra.mxu0 %v923
        %1057 = vmatprep.subr.mxu0 0.0
        %1058 = vmatpush1.msra.mxu0 %v924
        %1059 = vmatprep.subr.mxu0 0.0
        %1060 = vmatpush1.msra.mxu0 %v925
        %1061 = vmatprep.subr.mxu0 0.0
        %1062 = vmatpush1.msra.mxu0 %v926
        %1063 = vmatprep.subr.mxu0 0.0
        %1064 = vmatpush1.msra.mxu0 %v927
        %1065 = vmatprep.subr.mxu0 0.0
        %1066 = vmatpush1.msra.mxu0 %v928
        %1067 = vmatprep.subr.mxu0 0.0
        %1068 = vmatpush1.msra.mxu0 %v929
        %1069 = vmatprep.subr.mxu0 0.0
        %1070 = vmatpush1.msra.mxu0 %v930
        %1071 = vmatprep.subr.mxu0 0.0
        %1072 = vmatpush1.msra.mxu0 %v931
        %1073 = vmatprep.subr.mxu0 0.0
        %1074 = vmatpush1.msra.mxu0 %v932
        %1075 = vmatprep.subr.mxu0 0.0
        %1076 = vmatpush1.msra.mxu0 %v933
        %1077 = vmatprep.subr.mxu0 0.0
        %1078 = vmatpush1.msra.mxu0 %v934
        %1079 = vmatprep.subr.mxu0 0.0
        %1080 = vmatpush1.msra.mxu0 %v935
        %1081 = vmatprep.subr.mxu0 0.0
        %1082 = vmatpush1.msra.mxu0 %v936
        %1083 = vmatprep.subr.mxu0 0.0
        %1084 = vmatpush1.msra.mxu0 %v937
        %1085 = vmatprep.subr.mxu0 0.0
        %1086 = vmatpush1.msra.mxu0 %v938
        %1087 = vmatprep.subr.mxu0 0.0
        %1088 = vmatpush1.msra.mxu0 %v939
        %1089 = vmatprep.mubr.f32.mxu0 %v863
        %1090 = vmatmul.mubr.f32.gmra.mrb[0].mxu0 %v862
        %v1091 = vpop.f32.mrb[0].mxu0
        %v1092 = vadd.f32 %v1007, %v1091
        %v1093 = vpop.f32.mrb[0].mxu0
        %1094 = vmatprep.mubr.f32.mxu0 %v867
        %1095 = vmatmul.mubr.f32.gmra.mrb[0].mxu0 %v866
        %v1096 = vpop.f32.mrb[0].mxu0
        %v1097 = vadd.f32 %v1012, %v1096
        %v1098 = vpop.f32.mrb[0].mxu0
        %1099 = vmatprep.mubr.f32.mxu0 %v871
        %1100 = vmatmul.mubr.f32.gmra.mrb[0].mxu0 %v870
        %v1101 = vpop.f32.mrb[0].mxu0
        %v1102 = vadd.f32 %v1017, %v1101
        %v1103 = vpop.f32.mrb[0].mxu0
        %1104 = vmatprep.mubr.f32.mxu0 %v875
        %1105 = vmatmul.mubr.f32.gmra.mrb[0].mxu0 %v874
        %v1106 = vpop.f32.mrb[0].mxu0
        %v1107 = vadd.f32 %v1022, %v1106
        %v1108 = vpop.f32.mrb[0].mxu0
        %1109 = vdwg.mxu0
        %v1110 = vrcp.pop %v656
        %v1111 = vrcp.pop %v661
        %v1112 = vrcp.pop %v666
        %v1113 = vrcp.pop %v671
        %v1114 = vmul.f32 %v656, %v1110
        %v1115 = vmul.f32 %v661, %v1111
        %v1116 = vmul.f32 %v666, %v1112
        %v1117 = vmul.f32 %v671, %v1113
        %v1118 = vsub.f32 2.0, %v1114
        %v1119 = vsub.f32 2.0, %v1115
        %v1120 = vsub.f32 2.0, %v1116
        %v1121 = vsub.f32 2.0, %v1117
        %v1122 = vmul.f32 %v1110, %v1118
        %v1123 = vmul.f32 %v1111, %v1119
        %v1124 = vmul.f32 %v1112, %v1120
        %v1125 = vmul.f32 %v1113, %v1121
        %v1126 = vmul.f32 %v1092, %v1122
        %v1127 = vmul.f32 %v1097, %v1123
        %v1128 = vmul.f32 %v1102, %v1124
        %v1129 = vmul.f32 %v1107, %v1125
        %1130 = vst [vmem:[%s287] sm:$0xff] %v1126
        %1131 = vst [vmem:[%s287 + $0x8] sm:$0xff] %v1127
        %1132 = vst [vmem:[%s287 + $0x10] sm:$0xff] %v1128
        %1133 = vst [vmem:[%s287 + $0x18] sm:$0xff] %v1129
        %s1134 = sand.u32 %s182, 1
        %s1135 = scalar_lea.sflag [#allocation4], %s1134
        %s1136 = sand.u32 %s182, 1
        %s1137 = smul.addr %s1136, 32
        %s1138 = scalar_lea.vmem [#allocation5], %s1137
        // Predicated region
        $region53: #{tpu_custom_call.1} parent=47 // pred_check
          %p1139 = pneg %p192
        $region54: #{tpu_custom_call.1} parent=47 // pred_check_branch
          %1141 = sbr.rel (%p1139) target = $region56
        $region55: #{tpu_custom_call.1} parent=47 // pred_region
          %s1142 = smul.u32 4, %s22
          %s1144 = ssub.s32 512, 512
          %1145 = vsyncadd %s1135, %s1144
          %s1146 = smul.addr %s1142, 128
          %s1147 = scalar_lea.hbm %s7, %s1146
          %s1148 = sshll.u32 %s1138, 4
          %s1149 = int_to_ptr.vmem [resolvable:$true] %s1148
          %1154 = dma.vmem_to_hbm [thread:$0]  %s1149, 512, %s1147, %s1135, 128, 128, 8
        $region56: #{tpu_custom_call.1} parent=47 // pred_fallthru
          _
      $region48: #{tpu_custom_call.1} parent=5 // pred_fallthru
        _
      %p1155 = scmp.le.s32.totalorder 2, %s17
      // Predicated region
      $region57: #{tpu_custom_call.1} parent=5 // pred_check
        %p1156 = pneg %p1155
      $region58: #{tpu_custom_call.1} parent=5 // pred_check_branch
        %1158 = sbr.rel (%p1156) target = $region60
      $region59: #{tpu_custom_call.1} parent=5 // pred_region
        %s1159 = ssub.s32 %s17, 2
        // Predicated region
        $region61: #{tpu_custom_call.1} parent=59 // pred_check
          %p1160 = pneg %p198
        $region62: #{tpu_custom_call.1} parent=59 // pred_check_branch
          %1162 = sbr.rel (%p1160) target = $region64
        $region63: #{tpu_custom_call.1} parent=59 // pred_region
          %s1163 = sand.u32 %s183, 1
          %s1164 = scalar_lea.sflag [#allocation4], %s1163
          %s1165 = sand.u32 %s183, 1
          %s1166 = smul.addr %s1165, 32
          %s1167 = scalar_lea.vmem [#allocation5], %s1166
          %1168 = dma.done %s1164, 512
        $region64: #{tpu_custom_call.1} parent=59 // pred_fallthru
          _
      $region60: #{tpu_custom_call.1} parent=5 // pred_fallthru
        _
    $region6: #{tpu_custom_call.1} parent=1 // loop_footer
      %s21 = sadd.s32 1, %s17
    $region7: #{tpu_custom_call.1} parent=1 // loop_footer_branch
      %16 = sbr.rel target = $region3
    $region8: #{tpu_custom_call.1} parent=1 // loop_exit
      _
    %1169 = vsyncpa [#allocation3], 1
    %s1170 = scalar_lea.sflag [#allocation3], 1
    %1171 = vsyncpa %s1170, 1
    %1172 = vsyncpa [#allocation4], 1
    %s1173 = scalar_lea.sflag [#allocation4], 1
    %1174 = vsyncpa %s1173, 1

</llo_original>
